<compile_context>
chip_gen: v6e
topology: v6e:2x2x1
jax: 0.10.0
libtpu: 0.0.40
codegen_flags: <defaults>
</compile_context>

<pallas_src>
import jax
import jax.numpy as jnp
from jax.experimental import pallas as pl
from jax.experimental.pallas import tpu as pltpu


_LANES = 128            # lane width of a vreg
_MAX_BLOCK_ROWS = 4096  # sublane-rows per grid step (4096*128 = 512K batch elems)


def _res_alloc_kernel(w_ref, x_ref, o_ref):
    # w_ref: (out_features,) f32 scalar-prefetch ref in SMEM
    # x_ref: (block_rows, 128) f32 in VMEM
    # o_ref: (out_features, block_rows, 128) in VMEM (f32 or bf16)
    x = x_ref[...]
    for j in range(o_ref.shape[0]):           # static unroll (out_features = 3)
        o_ref[j, :, :] = jax.nn.sigmoid(x * w_ref[j]).astype(o_ref.dtype)


def res_alloc_forward(x, weight, *, out_dtype=jnp.float32, feature_major=False):
    """Forward pass of ResAllocModel.

    x: (B, 1) float32, weight: (out_features, 1) float32.
    Returns (B, out_features) by default (PyTorch layout); (out_features, B)
    when feature_major=True (skips the post-kernel transpose entirely).
    """
    B, in_features = x.shape
    assert in_features == 1, "ResAllocModel has a single input feature"
    out_features = weight.shape[0]

    w_flat = weight.reshape(out_features).astype(jnp.float32)

    # Lane-dense batch layout: rows x 128 lanes; pad only to a multiple of 128.
    rows = -(-B // _LANES)                    # ceil(B / 128)
    padded = rows * _LANES
    block_rows = min(rows, _MAX_BLOCK_ROWS)

    x_flat = x.reshape(B).astype(jnp.float32)
    if padded != B:
        # TODO(synk): for very large non-aligned batches, handle the tail
        # in-kernel instead of this (tiny) pad copy.
        x_flat = jnp.pad(x_flat, (0, padded - B))
    x_lanes = x_flat.reshape(rows, _LANES)

    grid = (-(-rows // block_rows),)          # ragged last block is fine

    out_itemsize = jnp.dtype(out_dtype).itemsize
    cost = pl.CostEstimate(
        flops=out_features * padded,
        transcendentals=out_features * padded,
        bytes_accessed=padded * 4 + out_features * padded * out_itemsize,
    )

    out = pl.pallas_call(
        _res_alloc_kernel,
        out_shape=jax.ShapeDtypeStruct((out_features, rows, _LANES), out_dtype),
        grid_spec=pltpu.PrefetchScalarGridSpec(
            num_scalar_prefetch=1,            # weights land in SMEM once
            grid=grid,
            in_specs=[pl.BlockSpec((block_rows, _LANES), lambda i, w: (i, 0))],
            out_specs=pl.BlockSpec(
                (out_features, block_rows, _LANES), lambda i, w: (0, i, 0)),
        ),
        compiler_params=pltpu.CompilerParams(
            dimension_semantics=("parallel",),
            vmem_limit_bytes=40 << 20,
        ),
        cost_estimate=cost,
    )(w_flat, x_lanes)

    out2d = out.reshape(out_features, padded)[:, :B]   # (out_features, B)
    if feature_major:
        return out2d                                   # no transpose (fast path)
    return out2d.T                                     # PyTorch (B, out_features)


def _reference(x, weight):
    return jax.nn.sigmoid(x @ weight.T)


if __name__ == "__main__":
    key = jax.random.PRNGKey(0)
    kx, kw, kx2 = jax.random.split(key, 3)

    # Deterministic analogue of the PyTorch module's fc_op.weight (3, 1), no bias.
    weight = jax.random.normal(kw, (3, 1), dtype=jnp.float32) * 0.1

    # Small spec-like case (B=8, single input feature) -> (8, 3).
    batch = 8
    x = jax.random.normal(kx, (batch, 1), dtype=jnp.float32)
    y = res_alloc_forward(x, weight)
    jax.block_until_ready(y)
    y_ref = _reference(x, weight)
    assert y.shape == (batch, 3)
    assert jnp.allclose(y, y_ref, atol=2e-5), "mismatch vs reference (B=8)"

    # Ragged-batch case (B not a multiple of 128) exercising lane padding and
    # the output slicing path; also check the transpose-free feature-major path.
    batch2 = 300
    x2 = jax.random.normal(kx2, (batch2, 1), dtype=jnp.float32)
    y2 = res_alloc_forward(x2, weight)
    jax.block_until_ready(y2)
    y2_ref = _reference(x2, weight)
    assert y2.shape == (batch2, 3)
    assert jnp.allclose(y2, y2_ref, atol=2e-5), "mismatch vs reference (ragged B)"

    y2_fm = res_alloc_forward(x2, weight, feature_major=True)
    jax.block_until_ready(y2_fm)
    assert y2_fm.shape == (3, batch2)
    assert jnp.allclose(y2_fm, y2_ref.T, atol=2e-5), "mismatch (feature-major)"

    print("KERNEL_OK")
</pallas_src>

<mosaic_0001>
module attributes {stable_mosaic.version = 11 : i64} {
  func.func @_res_alloc_kernel(%arg0: i32, %arg1: memref<3xf32, #tpu.memory_space<smem>>, %arg2: memref<1x128xf32, #tpu.memory_space<vmem>>, %arg3: memref<3x1x128xf32, #tpu.memory_space<vmem>>) attributes {dimension_semantics = [#tpu.dimension_semantics<parallel>], iteration_bounds = array<i64: 1>, scalar_prefetch = 1 : i64, scratch_operands = 0 : i64, tpu.core_type = #tpu.core_type<tc>, window_params = [{transform_indices = @transform_0, window_bounds = array<i64: 1, 128>}, {transform_indices = @transform_1, window_bounds = array<i64: 3, 1, 128>}]} {
    %c0 = arith.constant 0 : index
    %c0_0 = arith.constant 0 : index
    %0 = vector.load %arg2[%c0, %c0_0] : memref<1x128xf32, #tpu.memory_space<vmem>>, vector<1x128xf32>
    %c0_1 = arith.constant 0 : index
    %1 = memref.load %arg1[%c0_1] : memref<3xf32, #tpu.memory_space<smem>>
    %2 = vector.broadcast %1 : f32 to vector<1x128xf32>
    %3 = arith.mulf %0, %2 : vector<1x128xf32>
    %4 = arith.negf %3 : vector<1x128xf32>
    %5 = math.exp %4 : vector<1x128xf32>
    %cst = arith.constant 1.000000e+00 : f32
    %6 = vector.broadcast %cst : f32 to vector<1x128xf32>
    %7 = arith.addf %6, %5 : vector<1x128xf32>
    %8 = arith.divf %6, %7 : vector<1x128xf32>
    %c0_2 = arith.constant 0 : index
    %c0_3 = arith.constant 0 : index
    %c0_4 = arith.constant 0 : index
    %9 = vector.load %arg3[%c0_2, %c0_3, %c0_4] : memref<3x1x128xf32, #tpu.memory_space<vmem>>, vector<1x1x128xf32>
    %10 = vector.shape_cast %9 : vector<1x1x128xf32> to vector<1x128xf32>
    %11 = vector.shape_cast %8 : vector<1x128xf32> to vector<1x1x128xf32>
    tpu.vector_store %arg3[%c0_2, %c0_3, %c0_4], %11 {strides = array<i32>} : memref<3x1x128xf32, #tpu.memory_space<vmem>>, vector<1x1x128xf32>,
    %c1 = arith.constant 1 : index
    %12 = memref.load %arg1[%c1] : memref<3xf32, #tpu.memory_space<smem>>
    %13 = vector.broadcast %12 : f32 to vector<1x128xf32>
    %14 = arith.mulf %0, %13 : vector<1x128xf32>
    %15 = arith.negf %14 : vector<1x128xf32>
    %16 = math.exp %15 : vector<1x128xf32>
    %cst_5 = arith.constant 1.000000e+00 : f32
    %17 = vector.broadcast %cst_5 : f32 to vector<1x128xf32>
    %18 = arith.addf %17, %16 : vector<1x128xf32>
    %19 = arith.divf %17, %18 : vector<1x128xf32>
    %c1_6 = arith.constant 1 : index
    %c0_7 = arith.constant 0 : index
    %c0_8 = arith.constant 0 : index
    %20 = vector.load %arg3[%c1_6, %c0_7, %c0_8] : memref<3x1x128xf32, #tpu.memory_space<vmem>>, vector<1x1x128xf32>
    %21 = vector.shape_cast %20 : vector<1x1x128xf32> to vector<1x128xf32>
    %22 = vector.shape_cast %19 : vector<1x128xf32> to vector<1x1x128xf32>
    tpu.vector_store %arg3[%c1_6, %c0_7, %c0_8], %22 {strides = array<i32>} : memref<3x1x128xf32, #tpu.memory_space<vmem>>, vector<1x1x128xf32>,
    %c2 = arith.constant 2 : index
    %23 = memref.load %arg1[%c2] : memref<3xf32, #tpu.memory_space<smem>>
    %24 = vector.broadcast %23 : f32 to vector<1x128xf32>
    %25 = arith.mulf %0, %24 : vector<1x128xf32>
    %26 = arith.negf %25 : vector<1x128xf32>
    %27 = math.exp %26 : vector<1x128xf32>
    %cst_9 = arith.constant 1.000000e+00 : f32
    %28 = vector.broadcast %cst_9 : f32 to vector<1x128xf32>
    %29 = arith.addf %28, %27 : vector<1x128xf32>
    %30 = arith.divf %28, %29 : vector<1x128xf32>
    %c2_10 = arith.constant 2 : index
    %c0_11 = arith.constant 0 : index
    %c0_12 = arith.constant 0 : index
    %31 = vector.load %arg3[%c2_10, %c0_11, %c0_12] : memref<3x1x128xf32, #tpu.memory_space<vmem>>, vector<1x1x128xf32>
    %32 = vector.shape_cast %31 : vector<1x1x128xf32> to vector<1x128xf32>
    %33 = vector.shape_cast %30 : vector<1x128xf32> to vector<1x1x128xf32>
    tpu.vector_store %arg3[%c2_10, %c0_11, %c0_12], %33 {strides = array<i32>} : memref<3x1x128xf32, #tpu.memory_space<vmem>>, vector<1x1x128xf32>,
    return
  }
  func.func @transform_0(%arg0: i32, %arg1: memref<3xf32, #tpu.memory_space<smem>>) -> (i32, i32) {
    %c0_i32 = arith.constant 0 : i32
    %c0_i32_0 = arith.constant 0 : i32
    return %arg0, %c0_i32 : i32, i32
  }
  func.func @transform_1(%arg0: i32, %arg1: memref<3xf32, #tpu.memory_space<smem>>) -> (i32, i32, i32) {
    %c0_i32 = arith.constant 0 : i32
    %c0_i32_0 = arith.constant 0 : i32
    %c0_i32_1 = arith.constant 0 : i32
    return %c0_i32, %arg0, %c0_i32_0 : i32, i32, i32
  }
}

</mosaic_0001>

<llo_original>
// kernel: tpu_custom_call.1
$region0: #{tpu_custom_call.1}
  #allocation0 [shape = 'u32[]', space=smem, size = 0x4, offset = 0x4, fixed_abs, tag = 'smem constant byte address 0x4 - core index']
  #allocation1 [shape = 'u32[144,128]{1,0:T(1,128)}', space=vmem, size = 0x12000, scoped, tag = 'internal scratch']
  #allocation2 [shape = 's32[1]{0}', space=sflag, size = 0x4, scoped, tag = 'scoped memory for tpu_custom_call.1']
  #allocation3 [shape = 'u8[512]{0}', space=smem, size = 0x200, scoped, tag = 'prefetched SMEM operand 0']
  %s0 = inlined_call_operand.hbm [shape: f32[3], index: 0, kind: input, shape index: {}]
  %s1 = inlined_call_operand.vmem [shape: f32[1,128], index: 1, kind: input, shape index: {}]
  %s2 = inlined_call_operand.hbm [shape: f32[3,1,128], index: 2, kind: output, shape index: {}]
  %s3 = sld [smem:[#allocation0]]
  $region14: #{tpu_custom_call.1} parent=0
    _
  %s5 = ssub.s32 1, %s3
  %s6 = scalar_select 0, %s5, %s3
  %8 = dma.hbm_to_smem %s0, 16, [#allocation3], [#allocation2]
  %9 = dma.done [#allocation2], 16
  %10 = sfence
  $region1: #{tpu_custom_call.1} parent=0
    #allocation4 [shape = 'u8[1536]{0}', space=vmem, size = 0x800, scoped, tag = 'output window, operand 0, single buffered']
    #allocation5 [shape = 's32[1]{0}', space=sflag, size = 0x4, scoped, tag = 'scoped memory for tpu_custom_call.1']
    %11 = vsyncpa [#allocation5], 0
    // Predicated region
    $region2: #{tpu_custom_call.1} parent=1 // pred_check
      _
    $region3: #{tpu_custom_call.1} parent=1 // pred_check_branch
      %13 = sbr.rel (0) target = $region5
    $region4: #{tpu_custom_call.1} parent=1 // pred_region
      _
    $region5: #{tpu_custom_call.1} parent=1 // pred_fallthru
      _
    %v14 = vld [vmem:[%s1] sm:$0x1]
    %s15 = sld [smem:[#allocation3]]
    %v16 = vstv %s15
    %v17 = vmul.f32 %v14, %v16
    %v18 = vxor.u32 %v17, 2147483648
    %v19 = vmul.f32 %v18, 1.442695
    %v20 = vpow.pop %v19
    %v21 = vadd.f32 %v20, 1.0
    %v22 = vrcp.pop %v21
    %v23 = vmul.f32 1.0, %v22
    %24 = vst [vmem:[#allocation4] sm:$0x1] %v23
    %s25 = sld [smem:[#allocation3 + $0x1]]
    %v26 = vstv %s25
    %v27 = vmul.f32 %v14, %v26
    %v28 = vxor.u32 %v27, 2147483648
    %v29 = vmul.f32 %v28, 1.442695
    %v30 = vpow.pop %v29
    %v31 = vadd.f32 %v30, 1.0
    %v32 = vrcp.pop %v31
    %v33 = vmul.f32 1.0, %v32
    %s34 = scalar_lea.vmem [#allocation4], 1
    %35 = vst [vmem:[%s34] sm:$0x1] %v33
    %s36 = sld [smem:[#allocation3 + $0x2]]
    %v37 = vstv %s36
    %v38 = vmul.f32 %v14, %v37
    %v39 = vxor.u32 %v38, 2147483648
    %v40 = vmul.f32 %v39, 1.442695
    %v41 = vpow.pop %v40
    %v42 = vadd.f32 %v41, 1.0
    %v43 = vrcp.pop %v42
    %v44 = vmul.f32 1.0, %v43
    %s45 = scalar_lea.vmem [#allocation4], 2
    %46 = vst [vmem:[%s45] sm:$0x1] %v44
    // Predicated region
    $region6: #{tpu_custom_call.1} parent=1 // pred_check
      _
    $region7: #{tpu_custom_call.1} parent=1 // pred_check_branch
      %48 = sbr.rel (0) target = $region9
    $region8: #{tpu_custom_call.1} parent=1 // pred_region
      %s50 = ssub.s32 48, 48
      %51 = vsyncadd [#allocation5], %s50
      %s52 = sshll.u32 [#allocation4], 4
      %s53 = int_to_ptr.vmem [resolvable:$true] %s52
      %58 = dma.vmem_to_hbm [thread:$0]  %s53, 48, %s2, [#allocation5], 16, 16, 1
    $region9: #{tpu_custom_call.1} parent=1 // pred_fallthru
      _
    // Predicated region
    $region10: #{tpu_custom_call.1} parent=1 // pred_check
      _
    $region11: #{tpu_custom_call.1} parent=1 // pred_check_branch
      %60 = sbr.rel (0) target = $region13
    $region12: #{tpu_custom_call.1} parent=1 // pred_region
      %61 = dma.done [#allocation5], 48
    $region13: #{tpu_custom_call.1} parent=1 // pred_fallthru
      _
    %62 = vsyncpa [#allocation5], 1

</llo_original>
